<compile_context>
chip_gen: v5e
topology: v5e:2x2
jax: 0.10.0
libtpu: 0.0.40
codegen_flags: <defaults>
</compile_context>

<pallas_src>
import math

import jax
import jax.numpy as jnp
from jax.experimental import pallas as pl
from jax.experimental.pallas import tpu as pltpu


def _pe_add_kernel(x_ref, pe_ref, o_ref):
    """o = x + pe; pe (block_s, 1, D) broadcasts over the batch (sublane) axis."""
    o_ref[...] = (x_ref[...].astype(jnp.float32) + pe_ref[...]).astype(o_ref.dtype)
    # TODO(synk): training-mode dropout (p=0.1) is stochastic and not applied;
    # eval-mode dropout is the identity, which this kernel reproduces.


def _pick_blocks(S, B, D, itemsize, *, target_bytes=2 << 20,
                 min_tile_bytes=1 << 20, min_steps=4):
    """Pick (block_s, block_b) for the 3-D [S, B, D] blocks.

    * (sublane, lane) dims of a block are (block_b, D).  D is never tiled;
      block_b is either full B or a multiple of the dtype's native sublane
      pack (8 for 4-byte, 16 for bf16, 32 for 1-byte dtypes).
    * Tile footprint is computed on the *padded* (sublane/lane) extents so the
      2 MiB target reflects real VMEM usage, not logical bytes.
    * block_s (leading dim, no alignment constraint) is shrunk toward
      >= min_steps total grid steps (>= 2 per v7x TensorCore), never below a
      ~1 MiB tile (per-step overhead would start to dominate a mem-bound add).
    """
    itemsize = max(int(itemsize), 1)
    pack = max(8, 32 // itemsize)            # native sublane packing
    d_pad = -(-D // 128) * 128               # lane padding of the last dim

    if B <= pack:
        block_b = B                          # full extent: always legal
    else:
        cap_b = max(pack, (target_bytes // (d_pad * itemsize)) // pack * pack)
        block_b = min(B // pack * pack, cap_b)
    b_pad = -(-block_b // pack) * pack       # padded sublane extent of the tile

    slice_bytes = b_pad * d_pad * itemsize   # one s-row of the padded tile
    block_s = max(1, min(S, target_bytes // slice_bytes))

    def steps(bs):
        return (-(-S // bs)) * (-(-B // block_b))

    while (steps(block_s) < min_steps and block_s > 1
           and ((block_s + 1) // 2) * slice_bytes >= min_tile_bytes):
        block_s = (block_s + 1) // 2
    return block_s, block_b


def positional_encoding(x, pos=0, *, block_s=None, block_b=None, donate_x=False):
    """Pallas equivalent of PositionalEncoding.forward(x, pos) in eval mode.

    x: [seq_len, batch, d_model].  When d_model % 128 != 0 the lane dim is
    partially masked in VMEM; since the kernel is a plain HBM-bound add (no
    in-kernel transcendentals) this only costs vreg/VMEM occupancy, not HBM
    bandwidth (the [S, B, D] row DMAs stay contiguous).
    """
    S, B, D = x.shape

    auto_bs, auto_bb = _pick_blocks(S, B, D, x.dtype.itemsize)
    if block_s is None:
        block_s = auto_bs
    if block_b is None:
        block_b = auto_bb

    # Positional encoding for timesteps pos .. pos+S-1, matching the module:
    #   div[d] = exp(d * (-ln(10000)/D));  pe[t, d] = sin(t*div[d]) + cos(t*div[d])
    # Computed once in the wrapper (tiny [S, D] slab) -> no per-element sin in
    # the kernel and no B-fold redundant transcendental work.
    position = jnp.arange(S, dtype=jnp.float32) + jnp.asarray(pos, jnp.float32)
    div_term = jnp.exp(jnp.arange(D, dtype=jnp.float32)
                       * jnp.float32(-math.log(10000.0) / D))
    angle = position[:, None] * div_term[None, :]
    pe = (jnp.sin(angle) + jnp.cos(angle))[:, None, :]        # [S, 1, D] f32

    grid = (pl.cdiv(S, block_s), pl.cdiv(B, block_b))          # ragged-safe

    out = pl.pallas_call(
        _pe_add_kernel,
        out_shape=jax.ShapeDtypeStruct((S, B, D), x.dtype),
        grid=grid,
        in_specs=[
            pl.BlockSpec((block_s, block_b, D), lambda i, j: (i, j, 0)),   # x tile
            pl.BlockSpec((block_s, 1, D), lambda i, j: (i, 0, 0)),         # pe rows
        ],
        out_specs=pl.BlockSpec((block_s, block_b, D), lambda i, j: (i, j, 0)),
        compiler_params=pltpu.CompilerParams(
            dimension_semantics=("parallel", "parallel")),
        # When the caller can donate x, alias it onto the output (same bytes
        # moved, half the HBM footprint for large activations).
        input_output_aliases=({0: 0} if donate_x else {}),
    )(x, pe)
    return out


def _reference(x, pos=0):
    """Pure-JAX reference mirroring the PyTorch module (eval mode)."""
    S, B, D = x.shape
    position = (jnp.arange(S, dtype=jnp.float32) + pos)[:, None]          # [S, 1]
    div_term = jnp.exp(jnp.arange(D, dtype=jnp.float32)
                       * (-math.log(10000.0) / D))                        # [D]
    pe = jnp.sin(position * div_term) + jnp.cos(position * div_term)      # [S, D]
    return (x.astype(jnp.float32) + pe[:, None, :]).astype(x.dtype)


if __name__ == "__main__":
    pos = 3

    # Small shape consistent with the module's forward: [seq, batch, d_model].
    S, B, D = 8, 2, 32
    x = jax.random.normal(jax.random.PRNGKey(0), (S, B, D), dtype=jnp.float32)
    out = jax.block_until_ready(positional_encoding(x, pos=pos))
    ref = _reference(x, pos=pos)
    assert out.shape == (S, B, D) and out.dtype == x.dtype
    assert jnp.allclose(out, ref, atol=1e-4, rtol=1e-5), "mismatch (f32)"

    # Multi-block grid over the sequence axis (exercises pipelining).
    x2 = jax.random.normal(jax.random.PRNGKey(1), (64, B, D), dtype=jnp.float32)
    out2 = jax.block_until_ready(positional_encoding(x2, pos=pos, block_s=16))
    assert jnp.allclose(out2, _reference(x2, pos=pos), atol=1e-4, rtol=1e-5), \
        "mismatch (tiled seq)"

    # Ragged grid: seq not a multiple of block_s, odd batch/d_model.
    x3 = jax.random.normal(jax.random.PRNGKey(2), (13, 3, 20), dtype=jnp.float32)
    out3 = jax.block_until_ready(positional_encoding(x3, pos=pos, block_s=8))
    assert jnp.allclose(out3, _reference(x3, pos=pos), atol=1e-4, rtol=1e-5), \
        "mismatch (ragged)"

    # TranAD-like shape (small window, larger batch), automatic block picking.
    x4 = jax.random.normal(jax.random.PRNGKey(3), (10, 64, 76), dtype=jnp.float32)
    out4 = jax.block_until_ready(positional_encoding(x4, pos=0))
    assert jnp.allclose(out4, _reference(x4, pos=0), atol=1e-4, rtol=1e-5), \
        "mismatch (tranad-like)"

    # bf16 input: f32 pe + f32 add, single cast on store; x donated onto out.
    xb = jax.random.normal(jax.random.PRNGKey(4), (32, 16, 32), dtype=jnp.bfloat16)
    outb = jax.block_until_ready(positional_encoding(xb, pos=pos, donate_x=True))
    refb = _reference(xb, pos=pos)
    assert outb.dtype == jnp.bfloat16
    assert jnp.allclose(outb.astype(jnp.float32), refb.astype(jnp.float32),
                        atol=3e-2, rtol=3e-2), "mismatch (bf16)"

    print("KERNEL_OK")
</pallas_src>

<mosaic_0001>
module attributes {stable_mosaic.version = 11 : i64} {
  func.func @_pe_add_kernel(%arg0: i32, %arg1: i32, %arg2: memref<8x2x32xf32, #tpu.memory_space<vmem>>, %arg3: memref<8x1x32xf32, #tpu.memory_space<vmem>>, %arg4: memref<8x2x32xf32, #tpu.memory_space<vmem>>) attributes {dimension_semantics = [#tpu.dimension_semantics<parallel>, #tpu.dimension_semantics<parallel>], iteration_bounds = array<i64: 1, 1>, scalar_prefetch = 0 : i64, scratch_operands = 0 : i64, tpu.core_type = #tpu.core_type<tc>, window_params = [{transform_indices = @transform_0, window_bounds = array<i64: 8, 2, 32>}, {transform_indices = @transform_1, window_bounds = array<i64: 8, 1, 32>}, {transform_indices = @transform_2, window_bounds = array<i64: 8, 2, 32>}]} {
    %c0 = arith.constant 0 : index
    %c0_0 = arith.constant 0 : index
    %c0_1 = arith.constant 0 : index
    %0 = vector.load %arg2[%c0, %c0_0, %c0_1] : memref<8x2x32xf32, #tpu.memory_space<vmem>>, vector<8x2x32xf32>
    %c0_2 = arith.constant 0 : index
    %c0_3 = arith.constant 0 : index
    %c0_4 = arith.constant 0 : index
    %1 = vector.load %arg3[%c0_2, %c0_3, %c0_4] : memref<8x1x32xf32, #tpu.memory_space<vmem>>, vector<8x1x32xf32>
    %2 = vector.broadcast %1 : vector<8x1x32xf32> to vector<8x2x32xf32>
    %3 = arith.addf %0, %2 : vector<8x2x32xf32>
    %c0_5 = arith.constant 0 : index
    %c0_6 = arith.constant 0 : index
    %c0_7 = arith.constant 0 : index
    %4 = vector.load %arg4[%c0_5, %c0_6, %c0_7] : memref<8x2x32xf32, #tpu.memory_space<vmem>>, vector<8x2x32xf32>
    tpu.vector_store %arg4[%c0_5, %c0_6, %c0_7], %3 {strides = array<i32>} : memref<8x2x32xf32, #tpu.memory_space<vmem>>, vector<8x2x32xf32>,
    return
  }
  func.func @transform_0(%arg0: i32, %arg1: i32) -> (i32, i32, i32) {
    %c0_i32 = arith.constant 0 : i32
    %c0_i32_0 = arith.constant 0 : i32
    return %arg0, %arg1, %c0_i32 : i32, i32, i32
  }
  func.func @transform_1(%arg0: i32, %arg1: i32) -> (i32, i32, i32) {
    %c0_i32 = arith.constant 0 : i32
    %c0_i32_0 = arith.constant 0 : i32
    %c0_i32_1 = arith.constant 0 : i32
    return %arg0, %c0_i32, %c0_i32_0 : i32, i32, i32
  }
  func.func @transform_2(%arg0: i32, %arg1: i32) -> (i32, i32, i32) {
    %c0_i32 = arith.constant 0 : i32
    %c0_i32_0 = arith.constant 0 : i32
    return %arg0, %arg1, %c0_i32 : i32, i32, i32
  }
}

</mosaic_0001>

<llo_original>
// kernel: tpu_custom_call.1
$region0: #{tpu_custom_call.1}
  #allocation0 [shape = 'u32[]', space=smem, size = 0x4, offset = 0x4, fixed_abs, tag = 'smem constant byte address 0x4 - core index']
  #allocation1 [shape = 'u32[72,128]{1,0:T(1,128)}', space=vmem, size = 0x9000, scoped, tag = 'internal scratch']
  %s0 = inlined_call_operand.hbm [shape: f32[8,2,32], index: 0, kind: input, shape index: {}]
  %s1 = inlined_call_operand.hbm [shape: f32[8,1,32], index: 1, kind: input, shape index: {}]
  %s2 = inlined_call_operand.hbm [shape: f32[8,2,32], index: 2, kind: output, shape index: {}]
  %s3 = sld [smem:[#allocation0]]
  $region26: #{tpu_custom_call.1} parent=0
    _
  %s5 = ssub.s32 1, %s3
  %s6 = scalar_select 0, %s5, %s3
  $region1: #{tpu_custom_call.1} parent=0
    #allocation2 [shape = 'u8[8192]{0}', space=vmem, size = 0x2000, scoped, tag = 'input window, operand 0, single buffered']
    #allocation3 [shape = 's32[1]{0}', space=sflag, size = 0x4, scoped, tag = 'scoped memory for tpu_custom_call.1']
    #allocation4 [shape = 's32[1]{0}', space=sflag, size = 0x4, scoped, tag = 'scoped memory for tpu_custom_call.1']
    #allocation5 [shape = 'u8[4096]{0}', space=vmem, size = 0x1000, scoped, tag = 'input window, operand 1, single buffered']
    #allocation6 [shape = 's32[1]{0}', space=sflag, size = 0x4, scoped, tag = 'scoped memory for tpu_custom_call.1']
    #allocation7 [shape = 'u8[8192]{0}', space=vmem, size = 0x2000, scoped, tag = 'output window, operand 0, single buffered']
    %7 = vsyncpa [#allocation3], 0
    %8 = vsyncpa [#allocation6], 0
    %9 = vsyncpa [#allocation4], 0
    // Predicated region
    $region2: #{tpu_custom_call.1} parent=1 // pred_check
      _
    $region3: #{tpu_custom_call.1} parent=1 // pred_check_branch
      %11 = sbr.rel (0) target = $region5
    $region4: #{tpu_custom_call.1} parent=1 // pred_region
      %13 = vsyncadd [#allocation3], 0
      %s14 = sshll.u32 %s0, 4
      %s15 = int_to_ptr.hbm [resolvable:$true] %s14
      %s16 = sshll.u32 [#allocation2], 4
      %s17 = int_to_ptr.vmem [resolvable:$true] %s16
      %22 = dma.hbm_to_vmem [thread:$0]  %s15, 256, %s17, [#allocation3], 32, 32, 2
    $region5: #{tpu_custom_call.1} parent=1 // pred_fallthru
      _
    // Predicated region
    $region6: #{tpu_custom_call.1} parent=1 // pred_check
      _
    $region7: #{tpu_custom_call.1} parent=1 // pred_check_branch
      %24 = sbr.rel (0) target = $region9
    $region8: #{tpu_custom_call.1} parent=1 // pred_region
      %26 = vsyncadd [#allocation6], 0
      %s27 = sshll.u32 %s1, 4
      %s28 = int_to_ptr.hbm [resolvable:$true] %s27
      %s29 = sshll.u32 [#allocation5], 4
      %s30 = int_to_ptr.vmem [resolvable:$true] %s29
      %35 = dma.hbm_to_vmem [thread:$0]  %s28, 128, %s30, [#allocation6], 16, 16, 1
    $region9: #{tpu_custom_call.1} parent=1 // pred_fallthru
      _
    // Predicated region
    $region10: #{tpu_custom_call.1} parent=1 // pred_check
      _
    $region11: #{tpu_custom_call.1} parent=1 // pred_check_branch
      %37 = sbr.rel (0) target = $region13
    $region12: #{tpu_custom_call.1} parent=1 // pred_region
      %39 = dma.done [#allocation3], 256
    $region13: #{tpu_custom_call.1} parent=1 // pred_fallthru
      _
    // Predicated region
    $region14: #{tpu_custom_call.1} parent=1 // pred_check
      _
    $region15: #{tpu_custom_call.1} parent=1 // pred_check_branch
      %41 = sbr.rel (0) target = $region17
    $region16: #{tpu_custom_call.1} parent=1 // pred_region
      %43 = dma.done [#allocation6], 128
    $region17: #{tpu_custom_call.1} parent=1 // pred_fallthru
      _
    %v44 = vld [vmem:[#allocation2] sm:$0x3]
    %v45 = vld [vmem:[#allocation2 + $0x2] sm:$0x3]
    %v46 = vld [vmem:[#allocation2 + $0x4] sm:$0x3]
    %v47 = vld [vmem:[#allocation2 + $0x6] sm:$0x3]
    %v48 = vld [vmem:[#allocation2 + $0x8] sm:$0x3]
    %v49 = vld [vmem:[#allocation2 + $0xa] sm:$0x3]
    %v50 = vld [vmem:[#allocation2 + $0xc] sm:$0x3]
    %v51 = vld [vmem:[#allocation2 + $0xe] sm:$0x3]
    %v52 = vld [vmem:[#allocation5] sm:$0x1]
    %v53 = vld [vmem:[#allocation5 + $0x1] sm:$0x1]
    %v54 = vld [vmem:[#allocation5 + $0x2] sm:$0x1]
    %v55 = vld [vmem:[#allocation5 + $0x3] sm:$0x1]
    %v56 = vld [vmem:[#allocation5 + $0x4] sm:$0x1]
    %v57 = vld [vmem:[#allocation5 + $0x5] sm:$0x1]
    %v58 = vld [vmem:[#allocation5 + $0x6] sm:$0x1]
    %v59 = vld [vmem:[#allocation5 + $0x7] sm:$0x1]
    %v68 = vperm.slane %v52, 0
    %v69 = vperm.slane %v53, 0
    %v70 = vperm.slane %v54, 0
    %v71 = vperm.slane %v55, 0
    %v72 = vperm.slane %v56, 0
    %v73 = vperm.slane %v57, 0
    %v74 = vperm.slane %v58, 0
    %v75 = vperm.slane %v59, 0
    %v84 = vadd.f32 %v44, %v68
    %v85 = vadd.f32 %v45, %v69
    %v86 = vadd.f32 %v46, %v70
    %v87 = vadd.f32 %v47, %v71
    %v88 = vadd.f32 %v48, %v72
    %v89 = vadd.f32 %v49, %v73
    %v90 = vadd.f32 %v50, %v74
    %v91 = vadd.f32 %v51, %v75
    %vm92 = vcmask 254976
    %93 = vst.msk [vmem:[#allocation7] sm:$0x3] %vm92, %v84
    %94 = vst.msk [vmem:[#allocation7 + $0x2] sm:$0x3] %vm92, %v85
    %95 = vst.msk [vmem:[#allocation7 + $0x4] sm:$0x3] %vm92, %v86
    %96 = vst.msk [vmem:[#allocation7 + $0x6] sm:$0x3] %vm92, %v87
    %97 = vst.msk [vmem:[#allocation7 + $0x8] sm:$0x3] %vm92, %v88
    %98 = vst.msk [vmem:[#allocation7 + $0xa] sm:$0x3] %vm92, %v89
    %99 = vst.msk [vmem:[#allocation7 + $0xc] sm:$0x3] %vm92, %v90
    %100 = vst.msk [vmem:[#allocation7 + $0xe] sm:$0x3] %vm92, %v91
    // Predicated region
    $region18: #{tpu_custom_call.1} parent=1 // pred_check
      _
    $region19: #{tpu_custom_call.1} parent=1 // pred_check_branch
      %102 = sbr.rel (0) target = $region21
    $region20: #{tpu_custom_call.1} parent=1 // pred_region
      %104 = vsyncadd [#allocation4], 0
      %s105 = sshll.u32 [#allocation7], 4
      %s106 = int_to_ptr.vmem [resolvable:$true] %s105
      %s107 = sshll.u32 %s2, 4
      %s108 = int_to_ptr.hbm [resolvable:$true] %s107
      %113 = dma.vmem_to_hbm [thread:$0]  %s106, 256, %s108, [#allocation4], 32, 32, 2
    $region21: #{tpu_custom_call.1} parent=1 // pred_fallthru
      _
    // Predicated region
    $region22: #{tpu_custom_call.1} parent=1 // pred_check
      _
    $region23: #{tpu_custom_call.1} parent=1 // pred_check_branch
      %115 = sbr.rel (0) target = $region25
    $region24: #{tpu_custom_call.1} parent=1 // pred_region
      %117 = dma.done [#allocation4], 256
    $region25: #{tpu_custom_call.1} parent=1 // pred_fallthru
      _
    %118 = vsyncpa [#allocation3], 1
    %119 = vsyncpa [#allocation6], 1
    %120 = vsyncpa [#allocation4], 1

</llo_original>
